<compile_context>
chip_gen: v5e
topology: v5e:2x2
jax: 0.10.0
libtpu: 0.0.40
codegen_flags: <defaults>
</compile_context>

<pallas_src>
import jax
import jax.numpy as jnp
import numpy as np
from jax import lax
from jax.experimental import pallas as pl
from jax.experimental.pallas import tpu as pltpu


def make_mha_kernel(num_heads: int, head_dim: int):
    H, D = num_heads, head_dim

    def mha_kernel(xq_ref, xk_ref, xv_ref, wq_ref, wk_ref, wv_ref, wo_ref,
                   bo_ref, out_ref):
        x_q = xq_ref[0]            # (N, E) bf16
        x_k = xk_ref[0]            # (N, E) bf16
        x_v = xv_ref[0]            # (N, E) bf16

        # Fused full-width projections for all heads at once.
        # (1/sqrt(D) scaling already folded into Wq host-side.)
        q_all = jnp.dot(x_q, wq_ref[...], preferred_element_type=jnp.float32)
        k_all = jnp.dot(x_k, wk_ref[...], preferred_element_type=jnp.float32)
        v_all = jnp.dot(x_v, wv_ref[...], preferred_element_type=jnp.float32)
        q_all = q_all.astype(jnp.bfloat16)      # bf16 MXU operands downstream
        k_all = k_all.astype(jnp.bfloat16)
        v_all = v_all.astype(jnp.bfloat16)

        # Per-head attention (small static unroll); results concatenated so
        # the output projection is a single full-K matmul.
        # TODO(synk): attn_mask (masked_fill with -inf) not wired in; the
        # module's forward is exercised here with attn_mask=None.
        o_heads = []
        for h in range(H):
            q_h = q_all[:, h * D:(h + 1) * D]   # (N, D)
            k_h = k_all[:, h * D:(h + 1) * D]   # (N, D)
            v_h = v_all[:, h * D:(h + 1) * D]   # (N, D)

            # q_h @ k_h^T without materializing a transpose of k_h.
            scores = lax.dot_general(
                q_h, k_h, (((1,), (1,)), ((), ())),
                preferred_element_type=jnp.float32)          # (N, N) f32

            # Numerically-stable softmax in f32; reciprocal on the EUP.
            scores = scores - jnp.max(scores, axis=-1, keepdims=True)
            p = jnp.exp(scores)
            inv = pl.reciprocal(jnp.sum(p, axis=-1, keepdims=True),
                                approx=True)
            attn = (p * inv).astype(jnp.bfloat16)

            o_h = jnp.dot(attn, v_h, preferred_element_type=jnp.float32)
            o_heads.append(o_h.astype(jnp.bfloat16))

        merged = jnp.concatenate(o_heads, axis=-1)           # (N, E) bf16

        # Single full-K output projection + bias; write the block once.
        out = jnp.dot(merged, wo_ref[...], preferred_element_type=jnp.float32)
        out_ref[0] = (out + bo_ref[...]).astype(out_ref.dtype)

    return mha_kernel


def multi_head_attention(xq, xk, xv, params, num_heads: int):
    """xq/xk/xv: (B, N, E) float32. Returns (B, N, E) float32."""
    B, N, E = xq.shape
    assert E % num_heads == 0
    D = E // num_heads
    scaling = 1.0 / float(np.sqrt(D))

    # bf16 MXU operands; f32 accumulation happens inside the kernel.
    # Fold the 1/sqrt(D) scaling into Wq (free, done once on the host).
    wq = (params["wq"] * scaling).astype(jnp.bfloat16)       # (E, E)
    wk = params["wk"].astype(jnp.bfloat16)                   # (E, E)
    wv = params["wv"].astype(jnp.bfloat16)                   # (E, E)
    wo = params["wo"].astype(jnp.bfloat16)                   # (E, E)
    bo = params["bo"].reshape(1, E).astype(jnp.float32)      # (1, E)

    xq_b = xq.astype(jnp.bfloat16)
    xk_b = xk.astype(jnp.bfloat16)
    xv_b = xv.astype(jnp.bfloat16)

    kernel = make_mha_kernel(num_heads, D)

    # NOTE: for long sequences / large E one would add a query-tile grid axis
    # (rows multiple of 8, lane-dense multiple-of-128 columns) and raise
    # vmem_limit_bytes; at these toy shapes everything fits trivially.
    grid_spec = pltpu.PrefetchScalarGridSpec(
        num_scalar_prefetch=0,
        grid=(B,),
        in_specs=[
            pl.BlockSpec((1, N, E), lambda b: (b, 0, 0)),    # xq
            pl.BlockSpec((1, N, E), lambda b: (b, 0, 0)),    # xk
            pl.BlockSpec((1, N, E), lambda b: (b, 0, 0)),    # xv
            pl.BlockSpec((E, E), lambda b: (0, 0)),          # wq (resident)
            pl.BlockSpec((E, E), lambda b: (0, 0)),          # wk (resident)
            pl.BlockSpec((E, E), lambda b: (0, 0)),          # wv (resident)
            pl.BlockSpec((E, E), lambda b: (0, 0)),          # wo (resident)
            pl.BlockSpec((1, E), lambda b: (0, 0)),          # bo (resident)
        ],
        out_specs=pl.BlockSpec((1, N, E), lambda b: (b, 0, 0)),
    )

    return pl.pallas_call(
        kernel,
        out_shape=jax.ShapeDtypeStruct((B, N, E), jnp.float32),
        grid_spec=grid_spec,
        compiler_params=pltpu.CompilerParams(
            dimension_semantics=("parallel",)),
    )(xq_b, xk_b, xv_b, wq, wk, wv, wo, bo)


def reference_mha(xq, xk, xv, params, num_heads: int):
    """Pure-JAX f32 reference mirroring the PyTorch forward."""
    B, N, E = xq.shape
    D = E // num_heads
    scaling = 1.0 / float(np.sqrt(D))

    def split(x):
        return x.reshape(B, N, num_heads, D).transpose(0, 2, 1, 3)  # (B,H,N,D)

    q = split(xq @ params["wq"])
    k = split(xk @ params["wk"])
    v = split(xv @ params["wv"])
    dot = scaling * jnp.einsum("bhnd,bhmd->bhnm", q, k)
    attn = jax.nn.softmax(dot, axis=-1)
    out = jnp.einsum("bhnm,bhmd->bhnd", attn, v)
    out = out.transpose(0, 2, 1, 3).reshape(B, N, E)
    return out @ params["wo"] + params["bo"]


if __name__ == "__main__":
    B, N, E, H = 2, 8, 32, 4

    key = jax.random.PRNGKey(0)
    k_xq, k_xk, k_xv, k_wq, k_wk, k_wv, k_wo, k_bo = jax.random.split(key, 8)

    xq = jax.random.normal(k_xq, (B, N, E), dtype=jnp.float32)
    xk = jax.random.normal(k_xk, (B, N, E), dtype=jnp.float32)
    xv = jax.random.normal(k_xv, (B, N, E), dtype=jnp.float32)

    params = {
        "wq": 0.1 * jax.random.normal(k_wq, (E, E), dtype=jnp.float32),
        "wk": 0.1 * jax.random.normal(k_wk, (E, E), dtype=jnp.float32),
        "wv": 0.1 * jax.random.normal(k_wv, (E, E), dtype=jnp.float32),
        "wo": 0.1 * jax.random.normal(k_wo, (E, E), dtype=jnp.float32),
        "bo": 0.1 * jax.random.normal(k_bo, (E,), dtype=jnp.float32),
    }

    out = multi_head_attention(xq, xk, xv, params, num_heads=H)
    out = jax.block_until_ready(out)

    ref = reference_mha(xq, xk, xv, params, num_heads=H)
    # Tolerance loosened vs the f32 reference because MXU operands are bf16
    # and the softmax denominator uses the approximate EUP reciprocal.
    np.testing.assert_allclose(np.asarray(out), np.asarray(ref),
                               rtol=3e-2, atol=3e-2)
    print("KERNEL_OK")
</pallas_src>

<mosaic_0001>
module attributes {stable_mosaic.version = 11 : i64} {
  func.func @mha_kernel(%arg0: i32, %arg1: memref<1x8x32xbf16, #tpu.memory_space<vmem>>, %arg2: memref<1x8x32xbf16, #tpu.memory_space<vmem>>, %arg3: memref<1x8x32xbf16, #tpu.memory_space<vmem>>, %arg4: memref<32x32xbf16, #tpu.memory_space<vmem>>, %arg5: memref<32x32xbf16, #tpu.memory_space<vmem>>, %arg6: memref<32x32xbf16, #tpu.memory_space<vmem>>, %arg7: memref<32x32xbf16, #tpu.memory_space<vmem>>, %arg8: memref<1x32xf32, #tpu.memory_space<vmem>>, %arg9: memref<1x8x32xf32, #tpu.memory_space<vmem>>) attributes {dimension_semantics = [#tpu.dimension_semantics<parallel>], iteration_bounds = array<i64: 2>, scalar_prefetch = 0 : i64, scratch_operands = 0 : i64, tpu.core_type = #tpu.core_type<tc>, window_params = [{transform_indices = @transform_0, window_bounds = array<i64: 1, 8, 32>}, {transform_indices = @transform_1, window_bounds = array<i64: 1, 8, 32>}, {transform_indices = @transform_2, window_bounds = array<i64: 1, 8, 32>}, {pipeline_mode = #tpu.pipeline_mode<synchronous>, transform_indices = @transform_3, window_bounds = array<i64: 32, 32>}, {pipeline_mode = #tpu.pipeline_mode<synchronous>, transform_indices = @transform_4, window_bounds = array<i64: 32, 32>}, {pipeline_mode = #tpu.pipeline_mode<synchronous>, transform_indices = @transform_5, window_bounds = array<i64: 32, 32>}, {pipeline_mode = #tpu.pipeline_mode<synchronous>, transform_indices = @transform_6, window_bounds = array<i64: 32, 32>}, {pipeline_mode = #tpu.pipeline_mode<synchronous>, transform_indices = @transform_7, window_bounds = array<i64: 1, 32>}, {transform_indices = @transform_8, window_bounds = array<i64: 1, 8, 32>}]} {
    %c0 = arith.constant 0 : index
    %c0_0 = arith.constant 0 : index
    %c0_1 = arith.constant 0 : index
    %0 = vector.load %arg1[%c0, %c0_0, %c0_1] : memref<1x8x32xbf16, #tpu.memory_space<vmem>>, vector<1x8x32xbf16>
    %1 = vector.shape_cast %0 : vector<1x8x32xbf16> to vector<8x32xbf16>
    %c0_2 = arith.constant 0 : index
    %c0_3 = arith.constant 0 : index
    %c0_4 = arith.constant 0 : index
    %2 = vector.load %arg2[%c0_2, %c0_3, %c0_4] : memref<1x8x32xbf16, #tpu.memory_space<vmem>>, vector<1x8x32xbf16>
    %3 = vector.shape_cast %2 : vector<1x8x32xbf16> to vector<8x32xbf16>
    %c0_5 = arith.constant 0 : index
    %c0_6 = arith.constant 0 : index
    %c0_7 = arith.constant 0 : index
    %4 = vector.load %arg3[%c0_5, %c0_6, %c0_7] : memref<1x8x32xbf16, #tpu.memory_space<vmem>>, vector<1x8x32xbf16>
    %5 = vector.shape_cast %4 : vector<1x8x32xbf16> to vector<8x32xbf16>
    %c0_8 = arith.constant 0 : index
    %c0_9 = arith.constant 0 : index
    %6 = vector.load %arg4[%c0_8, %c0_9] : memref<32x32xbf16, #tpu.memory_space<vmem>>, vector<32x32xbf16>
    %cst = arith.constant dense<0.000000e+00> : vector<8x32xf32>
    %7 = tpu.matmul %1, %6, %cst {dimension_numbers = #tpu.dot_dimension_numbers<[1], [0], [0], [1], [0, 0, 1, 1], [], []>} : vector<8x32xbf16>, vector<32x32xbf16>, vector<8x32xf32> -> vector<8x32xf32>
    %c0_10 = arith.constant 0 : index
    %c0_11 = arith.constant 0 : index
    %8 = vector.load %arg5[%c0_10, %c0_11] : memref<32x32xbf16, #tpu.memory_space<vmem>>, vector<32x32xbf16>
    %cst_12 = arith.constant dense<0.000000e+00> : vector<8x32xf32>
    %9 = tpu.matmul %3, %8, %cst_12 {dimension_numbers = #tpu.dot_dimension_numbers<[1], [0], [0], [1], [0, 0, 1, 1], [], []>} : vector<8x32xbf16>, vector<32x32xbf16>, vector<8x32xf32> -> vector<8x32xf32>
    %c0_13 = arith.constant 0 : index
    %c0_14 = arith.constant 0 : index
    %10 = vector.load %arg6[%c0_13, %c0_14] : memref<32x32xbf16, #tpu.memory_space<vmem>>, vector<32x32xbf16>
    %cst_15 = arith.constant dense<0.000000e+00> : vector<8x32xf32>
    %11 = tpu.matmul %5, %10, %cst_15 {dimension_numbers = #tpu.dot_dimension_numbers<[1], [0], [0], [1], [0, 0, 1, 1], [], []>} : vector<8x32xbf16>, vector<32x32xbf16>, vector<8x32xf32> -> vector<8x32xf32>
    %12 = arith.truncf %7 : vector<8x32xf32> to vector<8x32xbf16>
    %13 = arith.truncf %9 : vector<8x32xf32> to vector<8x32xbf16>
    %14 = arith.truncf %11 : vector<8x32xf32> to vector<8x32xbf16>
    %15 = vector.extract_strided_slice %12 {offsets = [0, 0], sizes = [8, 8], strides = [1, 1]} : vector<8x32xbf16> to vector<8x8xbf16>
    %16 = vector.extract_strided_slice %13 {offsets = [0, 0], sizes = [8, 8], strides = [1, 1]} : vector<8x32xbf16> to vector<8x8xbf16>
    %17 = vector.extract_strided_slice %14 {offsets = [0, 0], sizes = [8, 8], strides = [1, 1]} : vector<8x32xbf16> to vector<8x8xbf16>
    %cst_16 = arith.constant dense<0.000000e+00> : vector<8x8xf32>
    %18 = tpu.matmul %15, %16, %cst_16 {dimension_numbers = #tpu.dot_dimension_numbers<[1], [1], [0], [0], [0, 0, 1, 0], [], []>} : vector<8x8xbf16>, vector<8x8xbf16>, vector<8x8xf32> -> vector<8x8xf32>
    %cst_17 = arith.constant dense<0xFF800000> : vector<8xf32>
    %19 = vector.multi_reduction <maximumf>, %18, %cst_17 [1] : vector<8x8xf32> to vector<8xf32>
    %20 = vector.shape_cast %19 : vector<8xf32> to vector<8x1xf32>
    %21 = vector.broadcast %20 : vector<8x1xf32> to vector<8x8xf32>
    %22 = arith.subf %18, %21 : vector<8x8xf32>
    %23 = math.exp %22 : vector<8x8xf32>
    %cst_18 = arith.constant dense<0.000000e+00> : vector<8xf32>
    %24 = vector.multi_reduction <add>, %23, %cst_18 [1] : vector<8x8xf32> to vector<8xf32>
    %25 = vector.shape_cast %24 : vector<8xf32> to vector<8x1xf32>
    %26 = tpu.reciprocal %25 {approx = true} : vector<8x1xf32> -> vector<8x1xf32>
    %27 = vector.broadcast %26 : vector<8x1xf32> to vector<8x8xf32>
    %28 = arith.mulf %23, %27 : vector<8x8xf32>
    %29 = arith.truncf %28 : vector<8x8xf32> to vector<8x8xbf16>
    %cst_19 = arith.constant dense<0.000000e+00> : vector<8x8xf32>
    %30 = tpu.matmul %29, %17, %cst_19 {dimension_numbers = #tpu.dot_dimension_numbers<[1], [0], [0], [1], [0, 0, 1, 1], [], []>} : vector<8x8xbf16>, vector<8x8xbf16>, vector<8x8xf32> -> vector<8x8xf32>
    %31 = arith.truncf %30 : vector<8x8xf32> to vector<8x8xbf16>
    %32 = vector.extract_strided_slice %12 {offsets = [0, 8], sizes = [8, 8], strides = [1, 1]} : vector<8x32xbf16> to vector<8x8xbf16>
    %33 = vector.extract_strided_slice %13 {offsets = [0, 8], sizes = [8, 8], strides = [1, 1]} : vector<8x32xbf16> to vector<8x8xbf16>
    %34 = vector.extract_strided_slice %14 {offsets = [0, 8], sizes = [8, 8], strides = [1, 1]} : vector<8x32xbf16> to vector<8x8xbf16>
    %cst_20 = arith.constant dense<0.000000e+00> : vector<8x8xf32>
    %35 = tpu.matmul %32, %33, %cst_20 {dimension_numbers = #tpu.dot_dimension_numbers<[1], [1], [0], [0], [0, 0, 1, 0], [], []>} : vector<8x8xbf16>, vector<8x8xbf16>, vector<8x8xf32> -> vector<8x8xf32>
    %cst_21 = arith.constant dense<0xFF800000> : vector<8xf32>
    %36 = vector.multi_reduction <maximumf>, %35, %cst_21 [1] : vector<8x8xf32> to vector<8xf32>
    %37 = vector.shape_cast %36 : vector<8xf32> to vector<8x1xf32>
    %38 = vector.broadcast %37 : vector<8x1xf32> to vector<8x8xf32>
    %39 = arith.subf %35, %38 : vector<8x8xf32>
    %40 = math.exp %39 : vector<8x8xf32>
    %cst_22 = arith.constant dense<0.000000e+00> : vector<8xf32>
    %41 = vector.multi_reduction <add>, %40, %cst_22 [1] : vector<8x8xf32> to vector<8xf32>
    %42 = vector.shape_cast %41 : vector<8xf32> to vector<8x1xf32>
    %43 = tpu.reciprocal %42 {approx = true} : vector<8x1xf32> -> vector<8x1xf32>
    %44 = vector.broadcast %43 : vector<8x1xf32> to vector<8x8xf32>
    %45 = arith.mulf %40, %44 : vector<8x8xf32>
    %46 = arith.truncf %45 : vector<8x8xf32> to vector<8x8xbf16>
    %cst_23 = arith.constant dense<0.000000e+00> : vector<8x8xf32>
    %47 = tpu.matmul %46, %34, %cst_23 {dimension_numbers = #tpu.dot_dimension_numbers<[1], [0], [0], [1], [0, 0, 1, 1], [], []>} : vector<8x8xbf16>, vector<8x8xbf16>, vector<8x8xf32> -> vector<8x8xf32>
    %48 = arith.truncf %47 : vector<8x8xf32> to vector<8x8xbf16>
    %49 = vector.extract_strided_slice %12 {offsets = [0, 16], sizes = [8, 8], strides = [1, 1]} : vector<8x32xbf16> to vector<8x8xbf16>
    %50 = vector.extract_strided_slice %13 {offsets = [0, 16], sizes = [8, 8], strides = [1, 1]} : vector<8x32xbf16> to vector<8x8xbf16>
    %51 = vector.extract_strided_slice %14 {offsets = [0, 16], sizes = [8, 8], strides = [1, 1]} : vector<8x32xbf16> to vector<8x8xbf16>
    %cst_24 = arith.constant dense<0.000000e+00> : vector<8x8xf32>
    %52 = tpu.matmul %49, %50, %cst_24 {dimension_numbers = #tpu.dot_dimension_numbers<[1], [1], [0], [0], [0, 0, 1, 0], [], []>} : vector<8x8xbf16>, vector<8x8xbf16>, vector<8x8xf32> -> vector<8x8xf32>
    %cst_25 = arith.constant dense<0xFF800000> : vector<8xf32>
    %53 = vector.multi_reduction <maximumf>, %52, %cst_25 [1] : vector<8x8xf32> to vector<8xf32>
    %54 = vector.shape_cast %53 : vector<8xf32> to vector<8x1xf32>
    %55 = vector.broadcast %54 : vector<8x1xf32> to vector<8x8xf32>
    %56 = arith.subf %52, %55 : vector<8x8xf32>
    %57 = math.exp %56 : vector<8x8xf32>
    %cst_26 = arith.constant dense<0.000000e+00> : vector<8xf32>
    %58 = vector.multi_reduction <add>, %57, %cst_26 [1] : vector<8x8xf32> to vector<8xf32>
    %59 = vector.shape_cast %58 : vector<8xf32> to vector<8x1xf32>
    %60 = tpu.reciprocal %59 {approx = true} : vector<8x1xf32> -> vector<8x1xf32>
    %61 = vector.broadcast %60 : vector<8x1xf32> to vector<8x8xf32>
    %62 = arith.mulf %57, %61 : vector<8x8xf32>
    %63 = arith.truncf %62 : vector<8x8xf32> to vector<8x8xbf16>
    %cst_27 = arith.constant dense<0.000000e+00> : vector<8x8xf32>
    %64 = tpu.matmul %63, %51, %cst_27 {dimension_numbers = #tpu.dot_dimension_numbers<[1], [0], [0], [1], [0, 0, 1, 1], [], []>} : vector<8x8xbf16>, vector<8x8xbf16>, vector<8x8xf32> -> vector<8x8xf32>
    %65 = arith.truncf %64 : vector<8x8xf32> to vector<8x8xbf16>
    %66 = vector.extract_strided_slice %12 {offsets = [0, 24], sizes = [8, 8], strides = [1, 1]} : vector<8x32xbf16> to vector<8x8xbf16>
    %67 = vector.extract_strided_slice %13 {offsets = [0, 24], sizes = [8, 8], strides = [1, 1]} : vector<8x32xbf16> to vector<8x8xbf16>
    %68 = vector.extract_strided_slice %14 {offsets = [0, 24], sizes = [8, 8], strides = [1, 1]} : vector<8x32xbf16> to vector<8x8xbf16>
    %cst_28 = arith.constant dense<0.000000e+00> : vector<8x8xf32>
    %69 = tpu.matmul %66, %67, %cst_28 {dimension_numbers = #tpu.dot_dimension_numbers<[1], [1], [0], [0], [0, 0, 1, 0], [], []>} : vector<8x8xbf16>, vector<8x8xbf16>, vector<8x8xf32> -> vector<8x8xf32>
    %cst_29 = arith.constant dense<0xFF800000> : vector<8xf32>
    %70 = vector.multi_reduction <maximumf>, %69, %cst_29 [1] : vector<8x8xf32> to vector<8xf32>
    %71 = vector.shape_cast %70 : vector<8xf32> to vector<8x1xf32>
    %72 = vector.broadcast %71 : vector<8x1xf32> to vector<8x8xf32>
    %73 = arith.subf %69, %72 : vector<8x8xf32>
    %74 = math.exp %73 : vector<8x8xf32>
    %cst_30 = arith.constant dense<0.000000e+00> : vector<8xf32>
    %75 = vector.multi_reduction <add>, %74, %cst_30 [1] : vector<8x8xf32> to vector<8xf32>
    %76 = vector.shape_cast %75 : vector<8xf32> to vector<8x1xf32>
    %77 = tpu.reciprocal %76 {approx = true} : vector<8x1xf32> -> vector<8x1xf32>
    %78 = vector.broadcast %77 : vector<8x1xf32> to vector<8x8xf32>
    %79 = arith.mulf %74, %78 : vector<8x8xf32>
    %80 = arith.truncf %79 : vector<8x8xf32> to vector<8x8xbf16>
    %cst_31 = arith.constant dense<0.000000e+00> : vector<8x8xf32>
    %81 = tpu.matmul %80, %68, %cst_31 {dimension_numbers = #tpu.dot_dimension_numbers<[1], [0], [0], [1], [0, 0, 1, 1], [], []>} : vector<8x8xbf16>, vector<8x8xbf16>, vector<8x8xf32> -> vector<8x8xf32>
    %82 = arith.truncf %81 : vector<8x8xf32> to vector<8x8xbf16>
    %83 = tpu.concatenate %31, %48, %65, %82 in 1 : vector<8x8xbf16>, vector<8x8xbf16>, vector<8x8xbf16>, vector<8x8xbf16> -> vector<8x32xbf16>
    %c0_32 = arith.constant 0 : index
    %c0_33 = arith.constant 0 : index
    %84 = vector.load %arg7[%c0_32, %c0_33] : memref<32x32xbf16, #tpu.memory_space<vmem>>, vector<32x32xbf16>
    %cst_34 = arith.constant dense<0.000000e+00> : vector<8x32xf32>
    %85 = tpu.matmul %83, %84, %cst_34 {dimension_numbers = #tpu.dot_dimension_numbers<[1], [0], [0], [1], [0, 0, 1, 1], [], []>} : vector<8x32xbf16>, vector<32x32xbf16>, vector<8x32xf32> -> vector<8x32xf32>
    %c0_35 = arith.constant 0 : index
    %c0_36 = arith.constant 0 : index
    %86 = vector.load %arg8[%c0_35, %c0_36] : memref<1x32xf32, #tpu.memory_space<vmem>>, vector<1x32xf32>
    %87 = vector.broadcast %86 : vector<1x32xf32> to vector<8x32xf32>
    %88 = arith.addf %85, %87 : vector<8x32xf32>
    %c0_37 = arith.constant 0 : index
    %c0_38 = arith.constant 0 : index
    %c0_39 = arith.constant 0 : index
    %89 = vector.load %arg9[%c0_37, %c0_38, %c0_39] : memref<1x8x32xf32, #tpu.memory_space<vmem>>, vector<1x8x32xf32>
    %90 = vector.shape_cast %89 : vector<1x8x32xf32> to vector<8x32xf32>
    %91 = vector.shape_cast %88 : vector<8x32xf32> to vector<1x8x32xf32>
    tpu.vector_store %arg9[%c0_37, %c0_38, %c0_39], %91 {strides = array<i32>} : memref<1x8x32xf32, #tpu.memory_space<vmem>>, vector<1x8x32xf32>,
    return
  }
  func.func @transform_0(%arg0: i32) -> (i32, i32, i32) {
    %c0_i32 = arith.constant 0 : i32
    %c0_i32_0 = arith.constant 0 : i32
    %c0_i32_1 = arith.constant 0 : i32
    return %arg0, %c0_i32, %c0_i32_0 : i32, i32, i32
  }
  func.func @transform_1(%arg0: i32) -> (i32, i32, i32) {
    %c0_i32 = arith.constant 0 : i32
    %c0_i32_0 = arith.constant 0 : i32
    %c0_i32_1 = arith.constant 0 : i32
    return %arg0, %c0_i32, %c0_i32_0 : i32, i32, i32
  }
  func.func @transform_2(%arg0: i32) -> (i32, i32, i32) {
    %c0_i32 = arith.constant 0 : i32
    %c0_i32_0 = arith.constant 0 : i32
    %c0_i32_1 = arith.constant 0 : i32
    return %arg0, %c0_i32, %c0_i32_0 : i32, i32, i32
  }
  func.func @transform_3(%arg0: i32) -> (i32, i32) {
    %c0_i32 = arith.constant 0 : i32
    %c0_i32_0 = arith.constant 0 : i32
    %c0_i32_1 = arith.constant 0 : i32
    return %c0_i32, %c0_i32_0 : i32, i32
  }
  func.func @transform_4(%arg0: i32) -> (i32, i32) {
    %c0_i32 = arith.constant 0 : i32
    %c0_i32_0 = arith.constant 0 : i32
    %c0_i32_1 = arith.constant 0 : i32
    return %c0_i32, %c0_i32_0 : i32, i32
  }
  func.func @transform_5(%arg0: i32) -> (i32, i32) {
    %c0_i32 = arith.constant 0 : i32
    %c0_i32_0 = arith.constant 0 : i32
    %c0_i32_1 = arith.constant 0 : i32
    return %c0_i32, %c0_i32_0 : i32, i32
  }
  func.func @transform_6(%arg0: i32) -> (i32, i32) {
    %c0_i32 = arith.constant 0 : i32
    %c0_i32_0 = arith.constant 0 : i32
    %c0_i32_1 = arith.constant 0 : i32
    return %c0_i32, %c0_i32_0 : i32, i32
  }
  func.func @transform_7(%arg0: i32) -> (i32, i32) {
    %c0_i32 = arith.constant 0 : i32
    %c0_i32_0 = arith.constant 0 : i32
    %c0_i32_1 = arith.constant 0 : i32
    return %c0_i32, %c0_i32_0 : i32, i32
  }
  func.func @transform_8(%arg0: i32) -> (i32, i32, i32) {
    %c0_i32 = arith.constant 0 : i32
    %c0_i32_0 = arith.constant 0 : i32
    %c0_i32_1 = arith.constant 0 : i32
    return %arg0, %c0_i32, %c0_i32_0 : i32, i32, i32
  }
}

</mosaic_0001>

<llo_original>
// kernel: tpu_custom_call.1
$region0: #{tpu_custom_call.1}
  #allocation0 [shape = 'u32[]', space=smem, size = 0x4, offset = 0x4, fixed_abs, tag = 'smem constant byte address 0x4 - core index']
  #allocation1 [shape = 'u32[72,128]{1,0:T(1,128)}', space=vmem, size = 0x9000, scoped, tag = 'internal scratch']
  %s0 = inlined_call_operand.hbm [shape: bf16[2,8,32], index: 0, kind: input, shape index: {}]
  %s1 = inlined_call_operand.hbm [shape: bf16[2,8,32], index: 1, kind: input, shape index: {}]
  %s2 = inlined_call_operand.hbm [shape: bf16[2,8,32], index: 2, kind: input, shape index: {}]
  %s3 = inlined_call_operand.hbm [shape: bf16[32,32], index: 3, kind: input, shape index: {}]
  %s4 = inlined_call_operand.hbm [shape: bf16[32,32], index: 4, kind: input, shape index: {}]
  %s5 = inlined_call_operand.hbm [shape: bf16[32,32], index: 5, kind: input, shape index: {}]
  %s6 = inlined_call_operand.hbm [shape: bf16[32,32], index: 6, kind: input, shape index: {}]
  %s7 = inlined_call_operand.vmem [shape: f32[1,32], index: 7, kind: input, shape index: {}]
  %s8 = inlined_call_operand.hbm [shape: f32[2,8,32], index: 8, kind: output, shape index: {}]
  %s9 = sld [smem:[#allocation0]]
  $region93: #{tpu_custom_call.1} parent=0
    _
  %s11 = ssub.s32 1, %s9
  %s12 = scalar_select 0, %s11, %s9
  $region1: #{tpu_custom_call.1} parent=0
    #allocation2 [shape = 'u8[4096]{0}', space=vmem, size = 0x1000, scoped, tag = 'input window, operand 0']
    #allocation3 [shape = 's32[2]{0}', space=sflag, size = 0x8, scoped, tag = 'scoped memory for tpu_custom_call.1']
    #allocation4 [shape = 's32[2]{0}', space=sflag, size = 0x8, scoped, tag = 'scoped memory for tpu_custom_call.1']
    #allocation5 [shape = 'u8[4096]{0}', space=vmem, size = 0x1000, scoped, tag = 'input window, operand 1']
    #allocation6 [shape = 's32[2]{0}', space=sflag, size = 0x8, scoped, tag = 'scoped memory for tpu_custom_call.1']
    #allocation7 [shape = 'u8[4096]{0}', space=vmem, size = 0x1000, scoped, tag = 'input window, operand 2']
    #allocation8 [shape = 'u8[8192]{0}', space=vmem, size = 0x2000, scoped, tag = 'input window, operand 3, single buffered']
    #allocation9 [shape = 's32[1]{0}', space=sflag, size = 0x4, scoped, tag = 'scoped memory for tpu_custom_call.1']
    #allocation10 [shape = 'u8[8192]{0}', space=vmem, size = 0x2000, scoped, tag = 'input window, operand 4, single buffered']
    #allocation11 [shape = 'u8[8192]{0}', space=vmem, size = 0x2000, scoped, tag = 'input window, operand 5, single buffered']
    #allocation12 [shape = 's32[1]{0}', space=sflag, size = 0x4, scoped, tag = 'scoped memory for tpu_custom_call.1']
    #allocation13 [shape = 'u8[8192]{0}', space=vmem, size = 0x2000, scoped, tag = 'input window, operand 6, single buffered']
    #allocation14 [shape = 'u8[8192]{0}', space=vmem, size = 0x2000, scoped, tag = 'output window, operand 0']
    %13 = vsyncpa [#allocation3], 0
    %s14 = scalar_lea.sflag [#allocation3], 1
    %15 = vsyncpa %s14, 0
    %16 = vsyncpa [#allocation6], 0
    %s17 = scalar_lea.sflag [#allocation6], 1
    %18 = vsyncpa %s17, 0
    %19 = vsyncpa [#allocation9], 0
    %20 = vsyncpa [#allocation12], 0
    %21 = vsyncpa [#allocation4], 0
    %s22 = scalar_lea.sflag [#allocation4], 1
    %23 = vsyncpa %s22, 0
    loop: start=0, step=1, limit=4
    $region2: #{tpu_custom_call.1} parent=1 // loop_pre_header
      _
    $region3: #{tpu_custom_call.1} parent=1 // loop_header
      %s25 = sphi 0, %s29
      %p26 = scmp.ge.s32.totalorder %s25, 4
      %s35 = sphi 0, %s37
      %s38 = sphi 0, %s35
      %s39 = sphi 0, %s38
      %s55 = sphi 0, %s39
      %s61 = sphi 0, %s63
      %s64 = sphi 0, %s61
      %s65 = sphi 0, %s64
      %s81 = sphi 0, %s65
      %s87 = sphi 0, %s89
      %s90 = sphi 0, %s87
      %s91 = sphi 0, %s90
      %s107 = sphi 0, %s91
      %s111 = sphi 0, %s111
      %s113 = sphi 0, %s111
      %s114 = sphi 0, %s113
      %s128 = sphi 0, %s114
      %s132 = sphi 0, %s132
      %s134 = sphi 0, %s132
      %s135 = sphi 0, %s134
      %s149 = sphi 0, %s135
      %s153 = sphi 0, %s153
      %s155 = sphi 0, %s153
      %s156 = sphi 0, %s155
      %s170 = sphi 0, %s156
      %s174 = sphi 0, %s174
      %s176 = sphi 0, %s174
      %s177 = sphi 0, %s176
      %s191 = sphi 0, %s177
      %s195 = sphi 0, %s195
      %s197 = sphi 0, %s195
      %s198 = sphi 0, %s197
      %s212 = sphi 0, %s198
      %s218 = sphi 0, %s220
      %s221 = sphi 0, %s218
      %s222 = sphi 0, %s221
      %s238 = sphi 0, %s222
    $region4: #{tpu_custom_call.1} parent=1 // loop_header_branch
      %28 = sbr.rel (%p26) target = $region8
    $region5: #{tpu_custom_call.1} parent=1 // loop_body
      %s30 = ssub.s32 %s25, 1
      %s31 = ssub.s32 %s25, 2
      %s32 = sadd.s32 %s25, 1
      %s33 = ssub.s32 %s25, %s32
      %p34 = scmp.eq.s32.totalorder %s33, 0
      %s36 = sadd.s32 %s35, 1
      %s37 = scalar_select %p34, %s35, %s36
      %p40 = pneg %p34
      %p41 = scmp.eq.s32.totalorder %s25, 1
      %p42 = por %p40, %p41
      %p43 = scmp.ne.s32.totalorder %s35, %s38
      %p44 = scmp.eq.s32.totalorder %s25, 0
      %p45 = por %p43, %p44
      %p46 = scmp.ne.s32.totalorder %s35, %s38
      %p47 = scmp.eq.s32.totalorder %s30, 1
      %p48 = por %p46, %p47
      %p49 = scmp.ne.s32.totalorder %s38, %s39
      %p50 = scmp.eq.s32.totalorder %s30, 0
      %p51 = por %p49, %p50
      %p52 = scmp.ne.s32.totalorder %s38, %s39
      %p53 = scmp.eq.s32.totalorder %s31, 1
      %p54 = por %p52, %p53
      %p56 = scmp.ne.s32.totalorder %s39, %s55
      %p57 = scmp.eq.s32.totalorder %s31, 0
      %p58 = por %p56, %p57
      %s59 = ssub.s32 %s25, %s32
      %p60 = scmp.eq.s32.totalorder %s59, 0
      %s62 = sadd.s32 %s61, 1
      %s63 = scalar_select %p60, %s61, %s62
      %p66 = pneg %p60
      %p67 = scmp.eq.s32.totalorder %s25, 1
      %p68 = por %p66, %p67
      %p69 = scmp.ne.s32.totalorder %s61, %s64
      %p70 = scmp.eq.s32.totalorder %s25, 0
      %p71 = por %p69, %p70
      %p72 = scmp.ne.s32.totalorder %s61, %s64
      %p73 = scmp.eq.s32.totalorder %s30, 1
      %p74 = por %p72, %p73
      %p75 = scmp.ne.s32.totalorder %s64, %s65
      %p76 = scmp.eq.s32.totalorder %s30, 0
      %p77 = por %p75, %p76
      %p78 = scmp.ne.s32.totalorder %s64, %s65
      %p79 = scmp.eq.s32.totalorder %s31, 1
      %p80 = por %p78, %p79
      %p82 = scmp.ne.s32.totalorder %s65, %s81
      %p83 = scmp.eq.s32.totalorder %s31, 0
      %p84 = por %p82, %p83
      %s85 = ssub.s32 %s25, %s32
      %p86 = scmp.eq.s32.totalorder %s85, 0
      %s88 = sadd.s32 %s87, 1
      %s89 = scalar_select %p86, %s87, %s88
      %p92 = pneg %p86
      %p93 = scmp.eq.s32.totalorder %s25, 1
      %p94 = por %p92, %p93
      %p95 = scmp.ne.s32.totalorder %s87, %s90
      %p96 = scmp.eq.s32.totalorder %s25, 0
      %p97 = por %p95, %p96
      %p98 = scmp.ne.s32.totalorder %s87, %s90
      %p99 = scmp.eq.s32.totalorder %s30, 1
      %p100 = por %p98, %p99
      %p101 = scmp.ne.s32.totalorder %s90, %s91
      %p102 = scmp.eq.s32.totalorder %s30, 0
      %p103 = por %p101, %p102
      %p104 = scmp.ne.s32.totalorder %s90, %s91
      %p105 = scmp.eq.s32.totalorder %s31, 1
      %p106 = por %p104, %p105
      %p108 = scmp.ne.s32.totalorder %s91, %s107
      %p109 = scmp.eq.s32.totalorder %s31, 0
      %p110 = por %p108, %p109
      %s112 = sadd.s32 %s111, 1
      %p115 = scmp.eq.s32.totalorder %s25, 1
      %p116 = scmp.ne.s32.totalorder %s111, %s113
      %p117 = scmp.eq.s32.totalorder %s25, 0
      %p118 = por %p116, %p117
      %p119 = scmp.ne.s32.totalorder %s111, %s113
      %p120 = scmp.eq.s32.totalorder %s30, 1
      %p121 = por %p119, %p120
      %p122 = scmp.ne.s32.totalorder %s113, %s114
      %p123 = scmp.eq.s32.totalorder %s30, 0
      %p124 = por %p122, %p123
      %p125 = scmp.ne.s32.totalorder %s113, %s114
      %p126 = scmp.eq.s32.totalorder %s31, 1
      %p127 = por %p125, %p126
      %p129 = scmp.ne.s32.totalorder %s114, %s128
      %p130 = scmp.eq.s32.totalorder %s31, 0
      %p131 = por %p129, %p130
      %s133 = sadd.s32 %s132, 1
      %p136 = scmp.eq.s32.totalorder %s25, 1
      %p137 = scmp.ne.s32.totalorder %s132, %s134
      %p138 = scmp.eq.s32.totalorder %s25, 0
      %p139 = por %p137, %p138
      %p140 = scmp.ne.s32.totalorder %s132, %s134
      %p141 = scmp.eq.s32.totalorder %s30, 1
      %p142 = por %p140, %p141
      %p143 = scmp.ne.s32.totalorder %s134, %s135
      %p144 = scmp.eq.s32.totalorder %s30, 0
      %p145 = por %p143, %p144
      %p146 = scmp.ne.s32.totalorder %s134, %s135
      %p147 = scmp.eq.s32.totalorder %s31, 1
      %p148 = por %p146, %p147
      %p150 = scmp.ne.s32.totalorder %s135, %s149
      %p151 = scmp.eq.s32.totalorder %s31, 0
      %p152 = por %p150, %p151
      %s154 = sadd.s32 %s153, 1
      %p157 = scmp.eq.s32.totalorder %s25, 1
      %p158 = scmp.ne.s32.totalorder %s153, %s155
      %p159 = scmp.eq.s32.totalorder %s25, 0
      %p160 = por %p158, %p159
      %p161 = scmp.ne.s32.totalorder %s153, %s155
      %p162 = scmp.eq.s32.totalorder %s30, 1
      %p163 = por %p161, %p162
      %p164 = scmp.ne.s32.totalorder %s155, %s156
      %p165 = scmp.eq.s32.totalorder %s30, 0
      %p166 = por %p164, %p165
      %p167 = scmp.ne.s32.totalorder %s155, %s156
      %p168 = scmp.eq.s32.totalorder %s31, 1
      %p169 = por %p167, %p168
      %p171 = scmp.ne.s32.totalorder %s156, %s170
      %p172 = scmp.eq.s32.totalorder %s31, 0
      %p173 = por %p171, %p172
      %s175 = sadd.s32 %s174, 1
      %p178 = scmp.eq.s32.totalorder %s25, 1
      %p179 = scmp.ne.s32.totalorder %s174, %s176
      %p180 = scmp.eq.s32.totalorder %s25, 0
      %p181 = por %p179, %p180
      %p182 = scmp.ne.s32.totalorder %s174, %s176
      %p183 = scmp.eq.s32.totalorder %s30, 1
      %p184 = por %p182, %p183
      %p185 = scmp.ne.s32.totalorder %s176, %s177
      %p186 = scmp.eq.s32.totalorder %s30, 0
      %p187 = por %p185, %p186
      %p188 = scmp.ne.s32.totalorder %s176, %s177
      %p189 = scmp.eq.s32.totalorder %s31, 1
      %p190 = por %p188, %p189
      %p192 = scmp.ne.s32.totalorder %s177, %s191
      %p193 = scmp.eq.s32.totalorder %s31, 0
      %p194 = por %p192, %p193
      %s196 = sadd.s32 %s195, 1
      %p199 = scmp.eq.s32.totalorder %s25, 1
      %p200 = scmp.ne.s32.totalorder %s195, %s197
      %p201 = scmp.eq.s32.totalorder %s25, 0
      %p202 = por %p200, %p201
      %p203 = scmp.ne.s32.totalorder %s195, %s197
      %p204 = scmp.eq.s32.totalorder %s30, 1
      %p205 = por %p203, %p204
      %p206 = scmp.ne.s32.totalorder %s197, %s198
      %p207 = scmp.eq.s32.totalorder %s30, 0
      %p208 = por %p206, %p207
      %p209 = scmp.ne.s32.totalorder %s197, %s198
      %p210 = scmp.eq.s32.totalorder %s31, 1
      %p211 = por %p209, %p210
      %p213 = scmp.ne.s32.totalorder %s198, %s212
      %p214 = scmp.eq.s32.totalorder %s31, 0
      %p215 = por %p213, %p214
      %s216 = ssub.s32 %s25, %s32
      %p217 = scmp.eq.s32.totalorder %s216, 0
      %s219 = sadd.s32 %s218, 1
      %s220 = scalar_select %p217, %s218, %s219
      %p223 = pneg %p217
      %p224 = scmp.eq.s32.totalorder %s25, 1
      %p225 = por %p223, %p224
      %p226 = scmp.ne.s32.totalorder %s218, %s221
      %p227 = scmp.eq.s32.totalorder %s25, 0
      %p228 = por %p226, %p227
      %p229 = scmp.ne.s32.totalorder %s218, %s221
      %p230 = scmp.eq.s32.totalorder %s30, 1
      %p231 = por %p229, %p230
      %p232 = scmp.ne.s32.totalorder %s221, %s222
      %p233 = scmp.eq.s32.totalorder %s30, 0
      %p234 = por %p232, %p233
      %p235 = scmp.ne.s32.totalorder %s221, %s222
      %p236 = scmp.eq.s32.totalorder %s31, 1
      %p237 = por %p235, %p236
      %p239 = scmp.ne.s32.totalorder %s222, %s238
      %p240 = scmp.eq.s32.totalorder %s31, 0
      %p241 = por %p239, %p240
      %p242 = scmp.le.s32.totalorder 1, %s25
      %p243 = scmp.lt.s32.totalorder %s25, 3
      %p244 = pnand %p242, %p243
      %p245 = pneg %p244
      // Predicated region
      $region9: #{tpu_custom_call.1} parent=5 // pred_check
        _
      $region10: #{tpu_custom_call.1} parent=5 // pred_check_branch
        %247 = sbr.rel (%p244) target = $region12
      $region11: #{tpu_custom_call.1} parent=5 // pred_region
        %s248 = ssub.s32 %s25, 1
        // Predicated region
        $region13: #{tpu_custom_call.1} parent=11 // pred_check
          %p249 = pneg %p124
        $region14: #{tpu_custom_call.1} parent=11 // pred_check_branch
          %251 = sbr.rel (%p249) target = $region16
        $region15: #{tpu_custom_call.1} parent=11 // pred_region
          %253 = vsyncadd [#allocation9], 0
          %s254 = sshll.u32 %s3, 4
          %s255 = int_to_ptr.hbm [resolvable:$true] %s254
          %s256 = sshll.u32 [#allocation8], 4
          %s257 = int_to_ptr.vmem [resolvable:$true] %s256
          %262 = dma.hbm_to_vmem [thread:$0]  %s255, 256, %s257, [#allocation9], 64, 64, 4
        $region16: #{tpu_custom_call.1} parent=11 // pred_fallthru
          _
        // Predicated region
        $region17: #{tpu_custom_call.1} parent=11 // pred_check
          %p263 = pneg %p145
        $region18: #{tpu_custom_call.1} parent=11 // pred_check_branch
          %265 = sbr.rel (%p263) target = $region20
        $region19: #{tpu_custom_call.1} parent=11 // pred_region
          %267 = vsyncadd [#allocation9], 0
          %s268 = sshll.u32 %s4, 4
          %s269 = int_to_ptr.hbm [resolvable:$true] %s268
          %s270 = sshll.u32 [#allocation10], 4
          %s271 = int_to_ptr.vmem [resolvable:$true] %s270
          %276 = dma.hbm_to_vmem [thread:$0]  %s269, 256, %s271, [#allocation9], 64, 64, 4
        $region20: #{tpu_custom_call.1} parent=11 // pred_fallthru
          _
        // Predicated region
        $region21: #{tpu_custom_call.1} parent=11 // pred_check
          %p277 = pneg %p166
        $region22: #{tpu_custom_call.1} parent=11 // pred_check_branch
          %279 = sbr.rel (%p277) target = $region24
        $region23: #{tpu_custom_call.1} parent=11 // pred_region
          %281 = vsyncadd [#allocation12], 0
          %s282 = sshll.u32 %s5, 4
          %s283 = int_to_ptr.hbm [resolvable:$true] %s282
          %s284 = sshll.u32 [#allocation11], 4
          %s285 = int_to_ptr.vmem [resolvable:$true] %s284
          %290 = dma.hbm_to_vmem [thread:$0]  %s283, 256, %s285, [#allocation12], 64, 64, 4
        $region24: #{tpu_custom_call.1} parent=11 // pred_fallthru
          _
        // Predicated region
        $region25: #{tpu_custom_call.1} parent=11 // pred_check
          %p291 = pneg %p187
        $region26: #{tpu_custom_call.1} parent=11 // pred_check_branch
          %293 = sbr.rel (%p291) target = $region28
        $region27: #{tpu_custom_call.1} parent=11 // pred_region
          %295 = vsyncadd [#allocation12], 0
          %s296 = sshll.u32 %s6, 4
          %s297 = int_to_ptr.hbm [resolvable:$true] %s296
          %s298 = sshll.u32 [#allocation13], 4
          %s299 = int_to_ptr.vmem [resolvable:$true] %s298
          %304 = dma.hbm_to_vmem [thread:$0]  %s297, 256, %s299, [#allocation12], 64, 64, 4
        $region28: #{tpu_custom_call.1} parent=11 // pred_fallthru
          _
        // Predicated region
        $region29: #{tpu_custom_call.1} parent=11 // pred_check
          %p305 = pneg %p208
        $region30: #{tpu_custom_call.1} parent=11 // pred_check_branch
          %307 = sbr.rel (%p305) target = $region32
        $region31: #{tpu_custom_call.1} parent=11 // pred_region
          _
        $region32: #{tpu_custom_call.1} parent=11 // pred_fallthru
          _
      $region12: #{tpu_custom_call.1} parent=5 // pred_fallthru
        _
      %p308 = scmp.lt.s32.totalorder %s25, 2
      // Predicated region
      $region33: #{tpu_custom_call.1} parent=5 // pred_check
        %p309 = pneg %p308
      $region34: #{tpu_custom_call.1} parent=5 // pred_check_branch
        %311 = sbr.rel (%p309) target = $region36
      $region35: #{tpu_custom_call.1} parent=5 // pred_region
        // Predicated region
        $region37: #{tpu_custom_call.1} parent=35 // pred_check
          %p312 = pneg %p45
        $region38: #{tpu_custom_call.1} parent=35 // pred_check_branch
          %314 = sbr.rel (%p312) target = $region40
        $region39: #{tpu_custom_call.1} parent=35 // pred_region
          %s315 = sand.u32 %s35, 1
          %s316 = scalar_lea.sflag [#allocation3], %s315
          %s317 = sand.u32 %s35, 1
          %s318 = smul.addr %s317, 4
          %s319 = scalar_lea.vmem [#allocation2], %s318
          %321 = vsyncadd %s316, 0
          %s322 = smul.addr %s25, 4
          %s323 = scalar_lea.hbm %s0, %s322
          %s325 = sshll.u32 %s323, 4
          %s326 = int_to_ptr.hbm [resolvable:$true] %s325
          %s327 = sshll.u32 %s319, 4
          %s328 = int_to_ptr.vmem [resolvable:$true] %s327
          %330 = dma.hbm_to_vmem [thread:$0]  %s326, 64, %s328, %s316
        $region40: #{tpu_custom_call.1} parent=35 // pred_fallthru
          _
        // Predicated region
        $region41: #{tpu_custom_call.1} parent=35 // pred_check
          %p331 = pneg %p71
        $region42: #{tpu_custom_call.1} parent=35 // pred_check_branch
          %333 = sbr.rel (%p331) target = $region44
        $region43: #{tpu_custom_call.1} parent=35 // pred_region
          %s334 = sand.u32 %s25, 1
          %s335 = scalar_lea.sflag [#allocation6], %s334
          %s336 = sand.u32 %s61, 1
          %s337 = smul.addr %s336, 4
          %s338 = scalar_lea.vmem [#allocation5], %s337
          %340 = vsyncadd %s335, 0
          %s341 = smul.addr %s25, 4
          %s342 = scalar_lea.hbm %s1, %s341
          %s344 = sshll.u32 %s342, 4
          %s345 = int_to_ptr.hbm [resolvable:$true] %s344
          %s346 = sshll.u32 %s338, 4
          %s347 = int_to_ptr.vmem [resolvable:$true] %s346
          %349 = dma.hbm_to_vmem [thread:$0]  %s345, 64, %s347, %s335
        $region44: #{tpu_custom_call.1} parent=35 // pred_fallthru
          _
        // Predicated region
        $region45: #{tpu_custom_call.1} parent=35 // pred_check
          %p350 = pneg %p97
        $region46: #{tpu_custom_call.1} parent=35 // pred_check_branch
          %352 = sbr.rel (%p350) target = $region48
        $region47: #{tpu_custom_call.1} parent=35 // pred_region
          %s353 = sand.u32 %s25, 1
          %s354 = scalar_lea.sflag [#allocation6], %s353
          %s355 = sand.u32 %s87, 1
          %s356 = smul.addr %s355, 4
          %s357 = scalar_lea.vmem [#allocation7], %s356
          %359 = vsyncadd %s354, 0
          %s360 = smul.addr %s25, 4
          %s361 = scalar_lea.hbm %s2, %s360
          %s363 = sshll.u32 %s361, 4
          %s364 = int_to_ptr.hbm [resolvable:$true] %s363
          %s365 = sshll.u32 %s357, 4
          %s366 = int_to_ptr.vmem [resolvable:$true] %s365
          %368 = dma.hbm_to_vmem [thread:$0]  %s364, 64, %s366, %s354
        $region48: #{tpu_custom_call.1} parent=35 // pred_fallthru
          _
      $region36: #{tpu_custom_call.1} parent=5 // pred_fallthru
        _
      %p369 = scmp.le.s32.totalorder 1, %s25
      %p370 = scmp.lt.s32.totalorder %s25, 3
      %p371 = pnand %p369, %p370
      %p372 = pneg %p371
      // Predicated region
      $region49: #{tpu_custom_call.1} parent=5 // pred_check
        _
      $region50: #{tpu_custom_call.1} parent=5 // pred_check_branch
        %374 = sbr.rel (%p371) target = $region52
      $region51: #{tpu_custom_call.1} parent=5 // pred_region
        %s375 = ssub.s32 %s25, 1
        %s376 = sand.u32 %s38, 1
        %s377 = scalar_lea.sflag [#allocation3], %s376
        %s378 = sand.u32 %s38, 1
        %s379 = smul.addr %s378, 4
        %s380 = scalar_lea.vmem [#allocation2], %s379
        // Predicated region
        $region53: #{tpu_custom_call.1} parent=51 // pred_check
          %p381 = pneg %p51
        $region54: #{tpu_custom_call.1} parent=51 // pred_check_branch
          %383 = sbr.rel (%p381) target = $region56
        $region55: #{tpu_custom_call.1} parent=51 // pred_region
          %385 = dma.done %s377, 64
        $region56: #{tpu_custom_call.1} parent=51 // pred_fallthru
          _
        %s386 = sand.u32 %s30, 1
        %s387 = scalar_lea.sflag [#allocation6], %s386
        %s388 = sand.u32 %s64, 1
        %s389 = smul.addr %s388, 4
        %s390 = scalar_lea.vmem [#allocation5], %s389
        // Predicated region
        $region57: #{tpu_custom_call.1} parent=51 // pred_check
          %p391 = pneg %p77
        $region58: #{tpu_custom_call.1} parent=51 // pred_check_branch
          %393 = sbr.rel (%p391) target = $region60
        $region59: #{tpu_custom_call.1} parent=51 // pred_region
          %395 = dma.done %s387, 64
        $region60: #{tpu_custom_call.1} parent=51 // pred_fallthru
          _
        %s396 = sand.u32 %s30, 1
        %s397 = scalar_lea.sflag [#allocation6], %s396
        %s398 = sand.u32 %s90, 1
        %s399 = smul.addr %s398, 4
        %s400 = scalar_lea.vmem [#allocation7], %s399
        // Predicated region
        $region61: #{tpu_custom_call.1} parent=51 // pred_check
          %p401 = pneg %p103
        $region62: #{tpu_custom_call.1} parent=51 // pred_check_branch
          %403 = sbr.rel (%p401) target = $region64
        $region63: #{tpu_custom_call.1} parent=51 // pred_region
          %405 = dma.done %s397, 64
        $region64: #{tpu_custom_call.1} parent=51 // pred_fallthru
          _
        // Predicated region
        $region65: #{tpu_custom_call.1} parent=51 // pred_check
          %p406 = pneg %p124
        $region66: #{tpu_custom_call.1} parent=51 // pred_check_branch
          %408 = sbr.rel (%p406) target = $region68
        $region67: #{tpu_custom_call.1} parent=51 // pred_region
          %410 = dma.done [#allocation9], 256
        $region68: #{tpu_custom_call.1} parent=51 // pred_fallthru
          _
        // Predicated region
        $region69: #{tpu_custom_call.1} parent=51 // pred_check
          %p411 = pneg %p145
        $region70: #{tpu_custom_call.1} parent=51 // pred_check_branch
          %413 = sbr.rel (%p411) target = $region72
        $region71: #{tpu_custom_call.1} parent=51 // pred_region
          %415 = dma.done [#allocation9], 256
        $region72: #{tpu_custom_call.1} parent=51 // pred_fallthru
          _
        // Predicated region
        $region73: #{tpu_custom_call.1} parent=51 // pred_check
          %p416 = pneg %p166
        $region74: #{tpu_custom_call.1} parent=51 // pred_check_branch
          %418 = sbr.rel (%p416) target = $region76
        $region75: #{tpu_custom_call.1} parent=51 // pred_region
          %420 = dma.done [#allocation12], 256
        $region76: #{tpu_custom_call.1} parent=51 // pred_fallthru
          _
        // Predicated region
        $region77: #{tpu_custom_call.1} parent=51 // pred_check
          %p421 = pneg %p187
        $region78: #{tpu_custom_call.1} parent=51 // pred_check_branch
          %423 = sbr.rel (%p421) target = $region80
        $region79: #{tpu_custom_call.1} parent=51 // pred_region
          %425 = dma.done [#allocation12], 256
        $region80: #{tpu_custom_call.1} parent=51 // pred_fallthru
          _
        %s426 = sand.u32 %s38, 1
        %s427 = scalar_lea.sflag [#allocation3], %s426
        %s428 = sand.u32 %s38, 1
        %s429 = smul.addr %s428, 4
        %s430 = scalar_lea.vmem [#allocation2], %s429
        %p431 = pneg %p51
        %p432 = pneg %p48
        %s433 = sand.u32 %s30, 1
        %s434 = scalar_lea.sflag [#allocation6], %s433
        %s435 = sand.u32 %s64, 1
        %s436 = smul.addr %s435, 4
        %s437 = scalar_lea.vmem [#allocation5], %s436
        %p438 = pneg %p77
        %p439 = pneg %p74
        %s440 = sand.u32 %s30, 1
        %s441 = scalar_lea.sflag [#allocation6], %s440
        %s442 = sand.u32 %s90, 1
        %s443 = smul.addr %s442, 4
        %s444 = scalar_lea.vmem [#allocation7], %s443
        %p445 = pneg %p103
        %p446 = pneg %p100
        %p447 = pneg %p124
        %p448 = pneg %p121
        %p449 = pneg %p145
        %p450 = pneg %p142
        %p451 = pneg %p166
        %p452 = pneg %p163
        %p453 = pneg %p187
        %p454 = pneg %p184
        %p455 = pneg %p208
        %p456 = pneg %p205
        %p457 = pneg %p234
        %p458 = pneg %p231
        %s459 = sand.u32 %s221, 1
        %s460 = scalar_lea.sflag [#allocation4], %s459
        %s461 = sand.u32 %s221, 1
        %s462 = smul.addr %s461, 8
        %s463 = scalar_lea.vmem [#allocation14], %s462
        %v465 = vld [vmem:[%s380] sm:$0xf]
        %v466 = vld [vmem:[%s390] sm:$0xf]
        %v467 = vld [vmem:[%s400] sm:$0xf]
        %v468 = vld [vmem:[#allocation8] sm:$0xf]
        %v469 = vld [vmem:[#allocation8 + $0x4] sm:$0xf]
        %v470 = vld [vmem:[#allocation8 + $0x8] sm:$0xf]
        %v471 = vld [vmem:[#allocation8 + $0xc] sm:$0xf]
        %v476 = vunpack.c.l.b16 %v468
        %v477 = vunpack.c.l.b16 %v469
        %v478 = vunpack.c.l.b16 %v470
        %v479 = vunpack.c.l.b16 %v471
        %v480 = vpack.c.b16 %v477, %v476
        %v481 = vpack.c.b16 %v479, %v478
        %vm484 = vcmask 261120
        %v486 = vsel %vm484, %v465, 0
        %488 = vmatpush.bf16.msra.mxu0 0
        %489 = vmatpush.bf16.msra.mxu0 0
        %490 = vmatpush.bf16.msra.mxu0 0
        %491 = vmatpush.bf16.msra.mxu0 0
        %492 = vmatpush.bf16.msra.mxu0 0
        %493 = vmatpush.bf16.msra.mxu0 0
        %494 = vmatpush.bf16.msra.mxu0 %v481
        %495 = vmatpush.bf16.msra.mxu0 %v480
        %496 = vmatmul.bf16.gmra.mxu0 %v486
        %v497 = vpop.f32.mrf.mxu0
        %v498 = vadd.f32 0.0, %v497
        %v499 = vpop.f32.mrf.mxu0
        %500 = vdwg.mxu0
        %v501 = vld [vmem:[#allocation10] sm:$0xf]
        %v502 = vld [vmem:[#allocation10 + $0x4] sm:$0xf]
        %v503 = vld [vmem:[#allocation10 + $0x8] sm:$0xf]
        %v504 = vld [vmem:[#allocation10 + $0xc] sm:$0xf]
        %v509 = vunpack.c.l.b16 %v501
        %v510 = vunpack.c.l.b16 %v502
        %v511 = vunpack.c.l.b16 %v503
        %v512 = vunpack.c.l.b16 %v504
        %v513 = vpack.c.b16 %v510, %v509
        %v514 = vpack.c.b16 %v512, %v511
        %v518 = vsel %vm484, %v466, 0
        %520 = vmatpush.bf16.msra.mxu0 0
        %521 = vmatpush.bf16.msra.mxu0 0
        %522 = vmatpush.bf16.msra.mxu0 0
        %523 = vmatpush.bf16.msra.mxu0 0
        %524 = vmatpush.bf16.msra.mxu0 0
        %525 = vmatpush.bf16.msra.mxu0 0
        %526 = vmatpush.bf16.msra.mxu0 %v514
        %527 = vmatpush.bf16.msra.mxu0 %v513
        %528 = vmatmul.bf16.gmra.mxu0 %v518
        %v529 = vpop.f32.mrf.mxu0
        %v530 = vadd.f32 0.0, %v529
        %v531 = vpop.f32.mrf.mxu0
        %532 = vdwg.mxu0
        %v533 = vld [vmem:[#allocation11] sm:$0xf]
        %v534 = vld [vmem:[#allocation11 + $0x4] sm:$0xf]
        %v535 = vld [vmem:[#allocation11 + $0x8] sm:$0xf]
        %v536 = vld [vmem:[#allocation11 + $0xc] sm:$0xf]
        %v541 = vunpack.c.l.b16 %v533
        %v542 = vunpack.c.l.b16 %v534
        %v543 = vunpack.c.l.b16 %v535
        %v544 = vunpack.c.l.b16 %v536
        %v545 = vpack.c.b16 %v542, %v541
        %v546 = vpack.c.b16 %v544, %v543
        %v550 = vsel %vm484, %v467, 0
        %552 = vmatpush.bf16.msra.mxu0 0
        %553 = vmatpush.bf16.msra.mxu0 0
        %554 = vmatpush.bf16.msra.mxu0 0
        %555 = vmatpush.bf16.msra.mxu0 0
        %556 = vmatpush.bf16.msra.mxu0 0
        %557 = vmatpush.bf16.msra.mxu0 0
        %558 = vmatpush.bf16.msra.mxu0 %v546
        %559 = vmatpush.bf16.msra.mxu0 %v545
        %560 = vmatmul.bf16.gmra.mxu0 %v550
        %v561 = vpop.f32.mrf.mxu0
        %v562 = vadd.f32 0.0, %v561
        %v563 = vpop.f32.mrf.mxu0
        %564 = vdwg.mxu0
        %v565 = vpack.c.bf16 %v498, %v498
        %v566 = vpack.c.bf16 %v530, %v530
        %v567 = vpack.c.bf16 %v562, %v562
        %vm568 = vcmask 64512
        %v570 = vsel %vm568, %v565, 0
        %v573 = vsel %vm568, %v566, 0
        %575 = vmatpush.bf16.xpose.msra.mxu0 0
        %576 = vmatpush.bf16.xpose.msra.mxu0 0
        %577 = vmatpush.bf16.xpose.msra.mxu0 0
        %578 = vmatpush.bf16.xpose.msra.mxu0 0
        %579 = vmatpush.bf16.xpose.msra.mxu0 0
        %580 = vmatpush.bf16.xpose.msra.mxu0 0
        %581 = vmatpush.bf16.xpose.msra.mxu0 0
        %582 = vmatpush.bf16.xpose.msra.mxu0 %v573
        %583 = vmatmul.bf16.gmra.mxu0 %v570
        %v584 = vpop.f32.mrf.mxu0
        %v585 = vadd.f32 0.0, %v584
        %v586 = vpop.f32.mrf.mxu0
        %587 = vdwg.mxu0
        %v588 = vsel %vm568, %v585, -inf
        %589 = vmax.xlane.f32.xlu0 %v588
        %v590 = vpop.xlane.xlu0 %589
        %v591 = vsub.f32 %v585, %v590
        %v592 = vmul.f32 %v591, 1.442695
        %v593 = vpow.pop %v592
        %v594 = vsel %vm568, %v593, 0.0
        %595 = vadd.xlane.f32.xlu0 %v594
        %v596 = vpop.xlane.xlu0 %595
        %v597 = vrcp.pop %v596
        %v598 = vmul.f32 %v593, %v597
        %v599 = vpack.c.bf16 %v598, %v598
        %v601 = vsel %vm568, %v599, 0
        %vm603 = vcmask 1043456
        %v605 = vsel %vm603, %v567, 0
        %607 = vmatpush.bf16.msra.mxu0 0
        %608 = vmatpush.bf16.msra.mxu0 0
        %609 = vmatpush.bf16.msra.mxu0 0
        %610 = vmatpush.bf16.msra.mxu0 0
        %611 = vmatpush.bf16.msra.mxu0 0
        %612 = vmatpush.bf16.msra.mxu0 0
        %613 = vmatpush.bf16.msra.mxu0 0
        %614 = vmatpush.bf16.msra.mxu0 %v605
        %615 = vmatmul.bf16.gmra.mxu0 %v601
        %v616 = vpop.f32.mrf.mxu0
        %v617 = vadd.f32 0.0, %v616
        %v618 = vpop.f32.mrf.mxu0
        %619 = vdwg.mxu0
        %v620 = vpack.c.bf16 %v617, %v617
        %v622 = vunpack.c.l.b16 %v565
        %v623 = vpack.c.b16 %v622, %v622
        %624 = vrot.lane.b32.xlu0 %v623, 120
        %v625 = vpop.permute.xlu0 %624
        %v627 = vunpack.c.l.b16 %v566
        %v628 = vpack.c.b16 %v627, %v627
        %629 = vrot.lane.b32.xlu0 %v628, 120
        %v630 = vpop.permute.xlu0 %629
        %v632 = vsel %vm568, %v625, 0
        %v635 = vsel %vm568, %v630, 0
        %637 = vmatpush.bf16.xpose.msra.mxu0 0
        %638 = vmatpush.bf16.xpose.msra.mxu0 0
        %639 = vmatpush.bf16.xpose.msra.mxu0 0
        %640 = vmatpush.bf16.xpose.msra.mxu0 0
        %641 = vmatpush.bf16.xpose.msra.mxu0 0
        %642 = vmatpush.bf16.xpose.msra.mxu0 0
        %643 = vmatpush.bf16.xpose.msra.mxu0 0
        %644 = vmatpush.bf16.xpose.msra.mxu0 %v635
        %645 = vmatmul.bf16.gmra.mxu0 %v632
        %v646 = vpop.f32.mrf.mxu0
        %v647 = vadd.f32 0.0, %v646
        %v648 = vpop.f32.mrf.mxu0
        %649 = vdwg.mxu0
        %v650 = vsel %vm568, %v647, -inf
        %651 = vmax.xlane.f32.xlu0 %v650
        %v652 = vpop.xlane.xlu0 %651
        %v653 = vsub.f32 %v647, %v652
        %v654 = vmul.f32 %v653, 1.442695
        %v655 = vpow.pop %v654
        %v656 = vsel %vm568, %v655, 0.0
        %657 = vadd.xlane.f32.xlu0 %v656
        %v658 = vpop.xlane.xlu0 %657
        %v659 = vrcp.pop %v658
        %v660 = vmul.f32 %v655, %v659
        %v661 = vpack.c.bf16 %v660, %v660
        %v663 = vunpack.c.l.b16 %v567
        %v664 = vpack.c.b16 %v663, %v663
        %665 = vrot.lane.b32.xlu0 %v664, 120
        %v666 = vpop.permute.xlu0 %665
        %v668 = vsel %vm568, %v661, 0
        %v671 = vsel %vm603, %v666, 0
        %673 = vmatpush.bf16.msra.mxu0 0
        %674 = vmatpush.bf16.msra.mxu0 0
        %675 = vmatpush.bf16.msra.mxu0 0
        %676 = vmatpush.bf16.msra.mxu0 0
        %677 = vmatpush.bf16.msra.mxu0 0
        %678 = vmatpush.bf16.msra.mxu0 0
        %679 = vmatpush.bf16.msra.mxu0 0
        %680 = vmatpush.bf16.msra.mxu0 %v671
        %681 = vmatmul.bf16.gmra.mxu0 %v668
        %v682 = vpop.f32.mrf.mxu0
        %v683 = vadd.f32 0.0, %v682
        %v684 = vpop.f32.mrf.mxu0
        %685 = vdwg.mxu0
        %v686 = vpack.c.bf16 %v683, %v683
        %687 = vrot.lane.b32.xlu0 %v623, 112
        %v688 = vpop.permute.xlu0 %687
        %689 = vrot.lane.b32.xlu0 %v628, 112
        %v690 = vpop.permute.xlu0 %689
        %v692 = vsel %vm568, %v688, 0
        %v695 = vsel %vm568, %v690, 0
        %697 = vmatpush.bf16.xpose.msra.mxu0 0
        %698 = vmatpush.bf16.xpose.msra.mxu0 0
        %699 = vmatpush.bf16.xpose.msra.mxu0 0
        %700 = vmatpush.bf16.xpose.msra.mxu0 0
        %701 = vmatpush.bf16.xpose.msra.mxu0 0
        %702 = vmatpush.bf16.xpose.msra.mxu0 0
        %703 = vmatpush.bf16.xpose.msra.mxu0 0
        %704 = vmatpush.bf16.xpose.msra.mxu0 %v695
        %705 = vmatmul.bf16.gmra.mxu0 %v692
        %v706 = vpop.f32.mrf.mxu0
        %v707 = vadd.f32 0.0, %v706
        %v708 = vpop.f32.mrf.mxu0
        %709 = vdwg.mxu0
        %v710 = vsel %vm568, %v707, -inf
        %711 = vmax.xlane.f32.xlu0 %v710
        %v712 = vpop.xlane.xlu0 %711
        %v713 = vsub.f32 %v707, %v712
        %v714 = vmul.f32 %v713, 1.442695
        %v715 = vpow.pop %v714
        %v716 = vsel %vm568, %v715, 0.0
        %717 = vadd.xlane.f32.xlu0 %v716
        %v718 = vpop.xlane.xlu0 %717
        %v719 = vrcp.pop %v718
        %v720 = vmul.f32 %v715, %v719
        %v721 = vpack.c.bf16 %v720, %v720
        %722 = vrot.lane.b32.xlu0 %v664, 112
        %v723 = vpop.permute.xlu0 %722
        %v725 = vsel %vm568, %v721, 0
        %v728 = vsel %vm603, %v723, 0
        %730 = vmatpush.bf16.msra.mxu0 0
        %731 = vmatpush.bf16.msra.mxu0 0
        %732 = vmatpush.bf16.msra.mxu0 0
        %733 = vmatpush.bf16.msra.mxu0 0
        %734 = vmatpush.bf16.msra.mxu0 0
        %735 = vmatpush.bf16.msra.mxu0 0
        %736 = vmatpush.bf16.msra.mxu0 0
        %737 = vmatpush.bf16.msra.mxu0 %v728
        %738 = vmatmul.bf16.gmra.mxu0 %v725
        %v739 = vpop.f32.mrf.mxu0
        %v740 = vadd.f32 0.0, %v739
        %v741 = vpop.f32.mrf.mxu0
        %742 = vdwg.mxu0
        %v743 = vpack.c.bf16 %v740, %v740
        %744 = vrot.lane.b32.xlu0 %v623, 104
        %v745 = vpop.permute.xlu0 %744
        %746 = vrot.lane.b32.xlu0 %v628, 104
        %v747 = vpop.permute.xlu0 %746
        %v749 = vsel %vm568, %v745, 0
        %v752 = vsel %vm568, %v747, 0
        %754 = vmatpush.bf16.xpose.msra.mxu0 0
        %755 = vmatpush.bf16.xpose.msra.mxu0 0
        %756 = vmatpush.bf16.xpose.msra.mxu0 0
        %757 = vmatpush.bf16.xpose.msra.mxu0 0
        %758 = vmatpush.bf16.xpose.msra.mxu0 0
        %759 = vmatpush.bf16.xpose.msra.mxu0 0
        %760 = vmatpush.bf16.xpose.msra.mxu0 0
        %761 = vmatpush.bf16.xpose.msra.mxu0 %v752
        %762 = vmatmul.bf16.gmra.mxu0 %v749
        %v763 = vpop.f32.mrf.mxu0
        %v764 = vadd.f32 0.0, %v763
        %v765 = vpop.f32.mrf.mxu0
        %766 = vdwg.mxu0
        %v767 = vsel %vm568, %v764, -inf
        %768 = vmax.xlane.f32.xlu0 %v767
        %v769 = vpop.xlane.xlu0 %768
        %v770 = vsub.f32 %v764, %v769
        %v771 = vmul.f32 %v770, 1.442695
        %v772 = vpow.pop %v771
        %v773 = vsel %vm568, %v772, 0.0
        %774 = vadd.xlane.f32.xlu0 %v773
        %v775 = vpop.xlane.xlu0 %774
        %v776 = vrcp.pop %v775
        %v777 = vmul.f32 %v772, %v776
        %v778 = vpack.c.bf16 %v777, %v777
        %779 = vrot.lane.b32.xlu0 %v664, 104
        %v780 = vpop.permute.xlu0 %779
        %v782 = vsel %vm568, %v778, 0
        %v785 = vsel %vm603, %v780, 0
        %787 = vmatpush.bf16.msra.mxu0 0
        %788 = vmatpush.bf16.msra.mxu0 0
        %789 = vmatpush.bf16.msra.mxu0 0
        %790 = vmatpush.bf16.msra.mxu0 0
        %791 = vmatpush.bf16.msra.mxu0 0
        %792 = vmatpush.bf16.msra.mxu0 0
        %793 = vmatpush.bf16.msra.mxu0 0
        %794 = vmatpush.bf16.msra.mxu0 %v785
        %795 = vmatmul.bf16.gmra.mxu0 %v782
        %v796 = vpop.f32.mrf.mxu0
        %v797 = vadd.f32 0.0, %v796
        %v798 = vpop.f32.mrf.mxu0
        %799 = vdwg.mxu0
        %v800 = vpack.c.bf16 %v797, %v797
        %v802 = vunpack.c.l.b16 %v686
        %v803 = vpack.c.b16 %v802, %v802
        %804 = vrot.lane.b32.xlu0 %v803, 8
        %v805 = vpop.permute.xlu0 %804
        %v807 = vunpack.c.l.b16 %v743
        %v808 = vpack.c.b16 %v807, %v807
        %809 = vrot.lane.b32.xlu0 %v808, 16
        %v810 = vpop.permute.xlu0 %809
        %v812 = vunpack.c.l.b16 %v800
        %v813 = vpack.c.b16 %v812, %v812
        %814 = vrot.lane.b32.xlu0 %v813, 24
        %v815 = vpop.permute.xlu0 %814
        %v818 = vsel %vm568, %v620, %v805
        %vm819 = vcmask 130048
        %v821 = vsel %vm819, %v818, %v810
        %vm822 = vcmask 195584
        %v824 = vsel %vm822, %v821, %v815
        %v825 = vld [vmem:[#allocation13] sm:$0xf]
        %v826 = vld [vmem:[#allocation13 + $0x4] sm:$0xf]
        %v827 = vld [vmem:[#allocation13 + $0x8] sm:$0xf]
        %v828 = vld [vmem:[#allocation13 + $0xc] sm:$0xf]
        %v829 = vld [vmem:[%s7] sm:$0x1]
        %v831 = vperm.slane %v829, 0
        %v837 = vunpack.c.l.b16 %v825
        %v838 = vunpack.c.l.b16 %v826
        %v839 = vunpack.c.l.b16 %v827
        %v840 = vunpack.c.l.b16 %v828
        %v841 = vpack.c.b16 %v838, %v837
        %v842 = vpack.c.b16 %v840, %v839
        %v845 = vsel %vm484, %v824, 0
        %847 = vmatpush.bf16.msra.mxu0 0
        %848 = vmatpush.bf16.msra.mxu0 0
        %849 = vmatpush.bf16.msra.mxu0 0
        %850 = vmatpush.bf16.msra.mxu0 0
        %851 = vmatpush.bf16.msra.mxu0 0
        %852 = vmatpush.bf16.msra.mxu0 0
        %853 = vmatpush.bf16.msra.mxu0 %v842
        %854 = vmatpush.bf16.msra.mxu0 %v841
        %855 = vmatmul.bf16.gmra.mxu0 %v845
        %v856 = vpop.f32.mrf.mxu0
        %v857 = vadd.f32 %v831, %v856
        %v858 = vpop.f32.mrf.mxu0
        %859 = vdwg.mxu0
        %860 = vst.msk [vmem:[%s463] sm:$0xff] %vm484, %v857
        %s861 = sand.u32 %s221, 1
        %s862 = scalar_lea.sflag [#allocation4], %s861
        %s863 = sand.u32 %s221, 1
        %s864 = smul.addr %s863, 8
        %s865 = scalar_lea.vmem [#allocation14], %s864
        // Predicated region
        $region81: #{tpu_custom_call.1} parent=51 // pred_check
          %p866 = pneg %p231
        $region82: #{tpu_custom_call.1} parent=51 // pred_check_branch
          %868 = sbr.rel (%p866) target = $region84
        $region83: #{tpu_custom_call.1} parent=51 // pred_region
          %870 = vsyncadd %s862, 0
          %s871 = smul.addr %s30, 8
          %s872 = scalar_lea.hbm %s8, %s871
          %s874 = sshll.u32 %s865, 4
          %s875 = int_to_ptr.vmem [resolvable:$true] %s874
          %s876 = sshll.u32 %s872, 4
          %s877 = int_to_ptr.hbm [resolvable:$true] %s876
          %879 = dma.vmem_to_hbm [thread:$0]  %s875, 128, %s877, %s862
        $region84: #{tpu_custom_call.1} parent=51 // pred_fallthru
          _
      $region52: #{tpu_custom_call.1} parent=5 // pred_fallthru
        _
      %p880 = scmp.le.s32.totalorder 2, %s25
      // Predicated region
      $region85: #{tpu_custom_call.1} parent=5 // pred_check
        %p881 = pneg %p880
      $region86: #{tpu_custom_call.1} parent=5 // pred_check_branch
        %883 = sbr.rel (%p881) target = $region88
      $region87: #{tpu_custom_call.1} parent=5 // pred_region
        %s884 = ssub.s32 %s25, 2
        // Predicated region
        $region89: #{tpu_custom_call.1} parent=87 // pred_check
          %p885 = pneg %p237
        $region90: #{tpu_custom_call.1} parent=87 // pred_check_branch
          %887 = sbr.rel (%p885) target = $region92
        $region91: #{tpu_custom_call.1} parent=87 // pred_region
          %s888 = sand.u32 %s222, 1
          %s889 = scalar_lea.sflag [#allocation4], %s888
          %s890 = sand.u32 %s222, 1
          %s891 = smul.addr %s890, 8
          %s892 = scalar_lea.vmem [#allocation14], %s891
          %894 = dma.done %s889, 128
        $region92: #{tpu_custom_call.1} parent=87 // pred_fallthru
          _
      $region88: #{tpu_custom_call.1} parent=5 // pred_fallthru
        _
    $region6: #{tpu_custom_call.1} parent=1 // loop_footer
      %s29 = sadd.s32 1, %s25
    $region7: #{tpu_custom_call.1} parent=1 // loop_footer_branch
      %24 = sbr.rel target = $region3
    $region8: #{tpu_custom_call.1} parent=1 // loop_exit
      _
    %895 = vsyncpa [#allocation3], 1
    %s896 = scalar_lea.sflag [#allocation3], 1
    %897 = vsyncpa %s896, 1
    %898 = vsyncpa [#allocation6], 1
    %s899 = scalar_lea.sflag [#allocation6], 1
    %900 = vsyncpa %s899, 1
    %901 = vsyncpa [#allocation9], 1
    %902 = vsyncpa [#allocation12], 1
    %903 = vsyncpa [#allocation4], 1
    %s904 = scalar_lea.sflag [#allocation4], 1
    %905 = vsyncpa %s904, 1

</llo_original>
